<compile_context>
chip_gen: v7x
topology: tpu7x:2x2x1
jax: 0.10.0
libtpu: 0.0.40
codegen_flags: <defaults>
</compile_context>

<pallas_src>
import functools

import jax
import jax.numpy as jnp
from jax.experimental import pallas as pl
from jax.experimental.pallas import tpu as pltpu

_NUM_BITS = 8
_BOUND = float(2 ** (_NUM_BITS - 1) - 1)  # 127.0
_MIN_BOUND = -_BOUND - 1.0                # -128.0 (narrow_range=False, signed)

# Candidate lane-dense slab widths (multiples of 128), widest first.
_WIDTHS = (4096, 2048, 1024, 512, 256, 128)
_DEFAULT_WIDTH = 1024  # used when no candidate divides the element count

# Per-generation tiling config:
#   tile_bytes : target bytes per input tile per grid step
#   min_steps  : minimum grid steps when rows permit (2 -> both v7x TCs run)
#   vmem_cap   : upper bound on the explicit scoped-VMEM budget we request
_GEN_CFG = {
    "v5e":     dict(tile_bytes=(3 << 19), min_steps=1, vmem_cap=(100 << 20)),  # 1.5 MiB
    "v6e":     dict(tile_bytes=(3 << 20), min_steps=1, vmem_cap=(100 << 20)),  # 3 MiB
    "v7x":     dict(tile_bytes=(5 << 20), min_steps=2, vmem_cap=(48 << 20)),   # 5 MiB
    "default": dict(tile_bytes=(2 << 20), min_steps=2, vmem_cap=(48 << 20)),   # 2 MiB
}


@functools.lru_cache(maxsize=1)
def _tpu_cfg():
    """Pick a tiling config from the local device kind (robust to failures)."""
    try:
        kind = jax.devices()[0].device_kind.lower()
    except Exception:  # pragma: no cover - defensive
        kind = ""
    if "v5 lite" in kind or "v5e" in kind or "v5lite" in kind:
        return _GEN_CFG["v5e"]
    if "v6" in kind:
        return _GEN_CFG["v6e"]
    if "v7" in kind or "7x" in kind:
        return _GEN_CFG["v7x"]
    return _GEN_CFG["default"]


def _quant_add_kernel(amax_ref, x_ref, y_ref, o_ref):
    """Fake-quantize both inputs with a shared per-tensor scale and add."""
    amax = amax_ref[0]                    # 1-D SMEM scalar
    scale = _BOUND / amax                 # scalar path, once per grid step
    inv_scale = 1.0 / scale

    x = x_ref[...].astype(jnp.float32)
    y = y_ref[...].astype(jnp.float32)
    qx = jnp.clip(jnp.round(x * scale), _MIN_BOUND, _BOUND)
    qy = jnp.clip(jnp.round(y * scale), _MIN_BOUND, _BOUND)
    # Single dequant multiply on the sum (exact: qx, qy are small integers).
    o_ref[...] = ((qx + qy) * inv_scale).astype(o_ref.dtype)


def _plain_add_kernel(x_ref, y_ref, o_ref):
    o_ref[...] = (x_ref[...] + y_ref[...]).astype(o_ref.dtype)


def _fq_jnp(v, amax):
    """Plain-jnp fake-quant (used only for the <width ragged tail)."""
    scale = _BOUND / amax
    q = jnp.clip(jnp.round(v.astype(jnp.float32) * scale), _MIN_BOUND, _BOUND)
    return q / scale


def _slab_width(n):
    """Widest lane-dense width dividing n with >= 8 rows; else any divisor;
    else a default width (caller handles the tail without padding)."""
    for w in _WIDTHS:
        if n % w == 0 and n // w >= 8:
            return w
    for w in _WIDTHS:
        if n % w == 0:
            return w
    return _DEFAULT_WIDTH


def _run_slab(xf2, yf2, amax_arr, quantization):
    """Run the Pallas kernel over a (rows, width) lane-dense slab."""
    rows, width = xf2.shape
    dtype = xf2.dtype
    elem_bytes = jnp.dtype(dtype).itemsize
    cfg = _tpu_cfg()

    # Row tile: target cfg['tile_bytes'] per input per grid step, rounded to
    # the dtype's minimum sublane multiple; full extent if the slab is small.
    sub = {1: 32, 2: 16}.get(elem_bytes, 8)
    target_rows = max(1, cfg["tile_bytes"] // (width * elem_bytes))
    if target_rows >= rows:
        tm = rows
    else:
        tm = max(sub, (target_rows // sub) * sub)

    # Guarantee >= min_steps grid steps when rows permit (v7x dual-TC).
    if cfg["min_steps"] > 1 and rows >= cfg["min_steps"] * sub:
        cap = max(sub, (rows // cfg["min_steps"] // sub) * sub)
        tm = min(tm, cap)

    grid = (pl.cdiv(rows, tm),)
    block = pl.BlockSpec((tm, width), lambda i: (i, 0))

    # Explicit VMEM budget: 3 arrays x 2 pipeline buffers x tile + headroom.
    tile_bytes = tm * width * elem_bytes
    vmem_limit = int(min(cfg["vmem_cap"], max(16 << 20, 3 * 2 * tile_bytes + (8 << 20))))
    cparams = pltpu.CompilerParams(
        dimension_semantics=("parallel",),
        vmem_limit_bytes=vmem_limit,
    )

    if quantization:
        return pl.pallas_call(
            _quant_add_kernel,
            out_shape=jax.ShapeDtypeStruct((rows, width), dtype),
            grid=grid,
            in_specs=[
                pl.BlockSpec(memory_space=pltpu.MemorySpace.SMEM),  # amax (1,)
                block,                                              # x tile
                block,                                              # y tile
            ],
            out_specs=block,
            compiler_params=cparams,
        )(amax_arr, xf2, yf2)
    return pl.pallas_call(
        _plain_add_kernel,
        out_shape=jax.ShapeDtypeStruct((rows, width), dtype),
        grid=grid,
        in_specs=[block, block],
        out_specs=block,
        compiler_params=cparams,
    )(xf2, yf2)


def quant_add(x, y, amax, quantization=True):
    """Pallas implementation of QuantAdd.forward(x, y)."""
    assert x.shape == y.shape and x.dtype == y.dtype
    orig_shape = x.shape
    dtype = x.dtype
    n = x.size

    # Guard amax <= 0 (uncalibrated quantizer) -> avoid inf scale / NaN out.
    amax_c = jnp.maximum(jnp.asarray(amax, jnp.float32), jnp.finfo(jnp.float32).tiny)
    amax_arr = amax_c.reshape(1)

    xf = x.reshape(-1)
    yf = y.reshape(-1)

    width = _slab_width(n)
    full_rows = n // width
    head = full_rows * width
    tail = n - head

    parts = []
    if full_rows:
        out2 = _run_slab(
            xf[:head].reshape(full_rows, width),
            yf[:head].reshape(full_rows, width),
            amax_arr,
            quantization,
        )
        parts.append(out2.reshape(-1))
    if tail:
        # Ragged tail (< width elements): cheap plain-jnp remainder, no padded
        # copies of the full tensors.
        xt, yt = xf[head:], yf[head:]
        if quantization:
            t = _fq_jnp(xt, amax_c) + _fq_jnp(yt, amax_c)
        else:
            t = xt.astype(jnp.float32) + yt.astype(jnp.float32)
        parts.append(t.astype(dtype))

    out = parts[0] if len(parts) == 1 else jnp.concatenate(parts)
    return out.reshape(orig_shape)


def _reference(x, y, amax, quantization=True):
    """Pure-JAX reference of the pytorch-quantization fake-quant add."""
    if not quantization:
        return x + y
    scale = _BOUND / amax

    def fq(v):
        return jnp.clip(jnp.round(v * scale), _MIN_BOUND, _BOUND) / scale

    return fq(x) + fq(y)


if __name__ == "__main__":
    key = jax.random.PRNGKey(0)
    kx, ky = jax.random.split(key)

    # Small NCHW inputs consistent with a conv feature-map residual add.
    x = jax.random.normal(kx, (2, 4, 16, 16), dtype=jnp.float32)
    y = jax.random.normal(ky, (2, 4, 16, 16), dtype=jnp.float32)

    # Deterministic "calibrated" amax for the shared TensorQuantizer buffer.
    amax = 2.5

    out = jax.block_until_ready(quant_add(x, y, amax, quantization=True))
    ref = _reference(x, y, amax, quantization=True)
    assert out.shape == x.shape and out.dtype == x.dtype
    assert jnp.max(jnp.abs(out - ref)) < 1e-5

    # quantization=False pass-through path.
    out_plain = jax.block_until_ready(quant_add(x, y, amax, quantization=False))
    assert jnp.max(jnp.abs(out_plain - (x + y))) < 1e-6

    # Multi-step grid on a large, evenly-divisible feature map:
    # 786432 elements -> (192, 4096) slab.
    kx2, ky2 = jax.random.split(jax.random.PRNGKey(1))
    x2 = jax.random.normal(kx2, (3, 64, 64, 64), dtype=jnp.float32)
    y2 = jax.random.normal(ky2, (3, 64, 64, 64), dtype=jnp.float32)
    out2 = jax.block_until_ready(quant_add(x2, y2, amax, quantization=True))
    ref2 = _reference(x2, y2, amax, quantization=True)
    assert jnp.max(jnp.abs(out2 - ref2)) < 1e-5

    # Ragged element count (3000 elems): kernel on the full rows, jnp tail,
    # no padded copies.
    kx3, ky3 = jax.random.split(jax.random.PRNGKey(2))
    x3 = jax.random.normal(kx3, (3, 1000), dtype=jnp.float32)
    y3 = jax.random.normal(ky3, (3, 1000), dtype=jnp.float32)
    out3 = jax.block_until_ready(quant_add(x3, y3, amax, quantization=True))
    ref3 = _reference(x3, y3, amax, quantization=True)
    assert out3.shape == x3.shape
    assert jnp.max(jnp.abs(out3 - ref3)) < 1e-5

    print("KERNEL_OK")
</pallas_src>

<mosaic_0001>
module attributes {stable_mosaic.version = 11 : i64} {
  func.func @_quant_add_kernel(%arg0: i32, %arg1: memref<1xf32, #tpu.memory_space<smem>>, %arg2: memref<8x256xf32, #tpu.memory_space<vmem>>, %arg3: memref<8x256xf32, #tpu.memory_space<vmem>>, %arg4: memref<8x256xf32, #tpu.memory_space<vmem>>) attributes {dimension_semantics = [#tpu.dimension_semantics<parallel>], iteration_bounds = array<i64: 1>, scalar_prefetch = 0 : i64, scratch_operands = 0 : i64, tpu.core_type = #tpu.core_type<tc>, window_params = [{transform_indices = @transform_0, window_bounds = array<i64: 1>}, {transform_indices = @transform_1, window_bounds = array<i64: 8, 256>}, {transform_indices = @transform_2, window_bounds = array<i64: 8, 256>}, {transform_indices = @transform_3, window_bounds = array<i64: 8, 256>}]} {
    %c0 = arith.constant 0 : index
    %0 = memref.load %arg1[%c0] : memref<1xf32, #tpu.memory_space<smem>>
    %cst = arith.constant 1.270000e+02 : f32
    %1 = arith.divf %cst, %0 : f32
    %cst_0 = arith.constant 1.000000e+00 : f32
    %2 = arith.divf %cst_0, %1 : f32
    %c0_1 = arith.constant 0 : index
    %c0_2 = arith.constant 0 : index
    %3 = vector.load %arg2[%c0_1, %c0_2] : memref<8x256xf32, #tpu.memory_space<vmem>>, vector<8x256xf32>
    %c0_3 = arith.constant 0 : index
    %c0_4 = arith.constant 0 : index
    %4 = vector.load %arg3[%c0_3, %c0_4] : memref<8x256xf32, #tpu.memory_space<vmem>>, vector<8x256xf32>
    %5 = vector.broadcast %1 : f32 to vector<8x256xf32>
    %6 = arith.mulf %3, %5 : vector<8x256xf32>
    %7 = math.roundeven %6 : vector<8x256xf32>
    %cst_5 = arith.constant -1.280000e+02 : f32
    %cst_6 = arith.constant 1.270000e+02 : f32
    %8 = vector.broadcast %cst_5 : f32 to vector<8x256xf32>
    %9 = arith.maximumf %8, %7 : vector<8x256xf32>
    %10 = vector.broadcast %cst_6 : f32 to vector<8x256xf32>
    %11 = arith.minimumf %10, %9 : vector<8x256xf32>
    %12 = vector.broadcast %1 : f32 to vector<8x256xf32>
    %13 = arith.mulf %4, %12 : vector<8x256xf32>
    %14 = math.roundeven %13 : vector<8x256xf32>
    %cst_7 = arith.constant -1.280000e+02 : f32
    %cst_8 = arith.constant 1.270000e+02 : f32
    %15 = vector.broadcast %cst_7 : f32 to vector<8x256xf32>
    %16 = arith.maximumf %15, %14 : vector<8x256xf32>
    %17 = vector.broadcast %cst_8 : f32 to vector<8x256xf32>
    %18 = arith.minimumf %17, %16 : vector<8x256xf32>
    %19 = arith.addf %11, %18 : vector<8x256xf32>
    %20 = vector.broadcast %2 : f32 to vector<8x256xf32>
    %21 = arith.mulf %19, %20 : vector<8x256xf32>
    %c0_9 = arith.constant 0 : index
    %c0_10 = arith.constant 0 : index
    %22 = vector.load %arg4[%c0_9, %c0_10] : memref<8x256xf32, #tpu.memory_space<vmem>>, vector<8x256xf32>
    tpu.vector_store %arg4[%c0_9, %c0_10], %21 {strides = array<i32>} : memref<8x256xf32, #tpu.memory_space<vmem>>, vector<8x256xf32>,
    return
  }
  func.func @transform_0(%arg0: i32) -> i32 {
    %c0_i32 = arith.constant 0 : i32
    %c0_i32_0 = arith.constant 0 : i32
    return %c0_i32 : i32
  }
  func.func @transform_1(%arg0: i32) -> (i32, i32) {
    %c0_i32 = arith.constant 0 : i32
    %c0_i32_0 = arith.constant 0 : i32
    return %arg0, %c0_i32 : i32, i32
  }
  func.func @transform_2(%arg0: i32) -> (i32, i32) {
    %c0_i32 = arith.constant 0 : i32
    %c0_i32_0 = arith.constant 0 : i32
    return %arg0, %c0_i32 : i32, i32
  }
  func.func @transform_3(%arg0: i32) -> (i32, i32) {
    %c0_i32 = arith.constant 0 : i32
    %c0_i32_0 = arith.constant 0 : i32
    return %arg0, %c0_i32 : i32, i32
  }
}

</mosaic_0001>

<llo_original>
// kernel: tpu_custom_call.1
$region0: #{tpu_custom_call.1}
  #allocation0 [shape = 'u32[]', space=smem, size = 0x4, offset = 0x4, fixed_abs, tag = 'smem constant byte address 0x4 - core index']
  #allocation1 [shape = 'u32[144,128]{1,0:T(1,128)}', space=vmem, size = 0x12000, scoped, tag = 'internal scratch']
  #allocation2 [shape = 'f32[1]{0:T(128)S(6)}', space=smem, size = 0x200, scoped, tag = 'scoped memory for tpu_custom_call.1']
  %s0 = inlined_call_operand.<no memory space> [shape: f32[1], index: 0, kind: input, shape index: {}]
  %s1 = inlined_call_operand.hbm [shape: f32[8,256], index: 1, kind: input, shape index: {}]
  %s2 = inlined_call_operand.hbm [shape: f32[8,256], index: 2, kind: input, shape index: {}]
  %s3 = inlined_call_operand.hbm [shape: f32[8,256], index: 3, kind: output, shape index: {}]
  %s4 = sld [smem:[#allocation0]]
  $region30: #{tpu_custom_call.1} parent=0
    _
  %s6 = ssub.s32 1, %s4
  %s7 = scalar_select 0, %s6, %s4
  %8 = sst [smem:[#allocation2]] %s0
  $region1: #{tpu_custom_call.1} parent=0
    #allocation3 [shape = 'u8[8192]{0}', space=vmem, size = 0x2000, scoped, tag = 'input window, operand 1, single buffered']
    #allocation4 [shape = 's32[1]{0}', space=sflag, size = 0x4, scoped, tag = 'scoped memory for tpu_custom_call.1']
    #allocation5 [shape = 's32[1]{0}', space=sflag, size = 0x4, scoped, tag = 'scoped memory for tpu_custom_call.1']
    #allocation6 [shape = 'u8[8192]{0}', space=vmem, size = 0x2000, scoped, tag = 'input window, operand 2, single buffered']
    #allocation7 [shape = 's32[1]{0}', space=sflag, size = 0x4, scoped, tag = 'scoped memory for tpu_custom_call.1']
    #allocation8 [shape = 'u8[8192]{0}', space=vmem, size = 0x2000, scoped, tag = 'output window, operand 0, single buffered']
    %9 = vsyncpa [#allocation4], 0
    %10 = vsyncpa [#allocation7], 0
    %11 = vsyncpa [#allocation5], 0
    // Predicated region
    $region2: #{tpu_custom_call.1} parent=1 // pred_check
      _
    $region3: #{tpu_custom_call.1} parent=1 // pred_check_branch
      %13 = sbr.rel (0) target = $region5
    $region4: #{tpu_custom_call.1} parent=1 // pred_region
      _
    $region5: #{tpu_custom_call.1} parent=1 // pred_fallthru
      _
    // Predicated region
    $region6: #{tpu_custom_call.1} parent=1 // pred_check
      _
    $region7: #{tpu_custom_call.1} parent=1 // pred_check_branch
      %15 = sbr.rel (0) target = $region9
    $region8: #{tpu_custom_call.1} parent=1 // pred_region
      %s17 = ssub.s32 256, 256
      %18 = vsyncadd [#allocation4], %s17
      %s20 = sshll.u32 [#allocation3], 4
      %s21 = int_to_ptr.vmem [resolvable:$true] %s20
      %23 = dma.hbm_to_vmem [thread:$0]  %s1, 256, %s21, [#allocation4]
    $region9: #{tpu_custom_call.1} parent=1 // pred_fallthru
      _
    // Predicated region
    $region10: #{tpu_custom_call.1} parent=1 // pred_check
      _
    $region11: #{tpu_custom_call.1} parent=1 // pred_check_branch
      %25 = sbr.rel (0) target = $region13
    $region12: #{tpu_custom_call.1} parent=1 // pred_region
      %s27 = ssub.s32 256, 256
      %28 = vsyncadd [#allocation7], %s27
      %s30 = sshll.u32 [#allocation6], 4
      %s31 = int_to_ptr.vmem [resolvable:$true] %s30
      %33 = dma.hbm_to_vmem [thread:$0]  %s2, 256, %s31, [#allocation7]
    $region13: #{tpu_custom_call.1} parent=1 // pred_fallthru
      _
    // Predicated region
    $region14: #{tpu_custom_call.1} parent=1 // pred_check
      _
    $region15: #{tpu_custom_call.1} parent=1 // pred_check_branch
      %35 = sbr.rel (0) target = $region17
    $region16: #{tpu_custom_call.1} parent=1 // pred_region
      %36 = dma.done [#allocation4], 256
    $region17: #{tpu_custom_call.1} parent=1 // pred_fallthru
      _
    // Predicated region
    $region18: #{tpu_custom_call.1} parent=1 // pred_check
      _
    $region19: #{tpu_custom_call.1} parent=1 // pred_check_branch
      %38 = sbr.rel (0) target = $region21
    $region20: #{tpu_custom_call.1} parent=1 // pred_region
      %39 = dma.done [#allocation7], 256
    $region21: #{tpu_custom_call.1} parent=1 // pred_fallthru
      _
    %s40 = sld [smem:[#allocation2]]
    %v41 = vstv %s40
    %v42 = vrcp.pop %v41
    %s43 = vtos %v42
    %s44 = smul.f32 127.0, %s43
    %v45 = vstv %s44
    %v46 = vrcp.pop %v45
    %s47 = vtos %v46
    %v48 = vld [vmem:[#allocation3] sm:$0xff]
    %v49 = vld [vmem:[#allocation3 + $0x8] sm:$0xff]
    %v50 = vld [vmem:[#allocation6] sm:$0xff]
    %v51 = vld [vmem:[#allocation6 + $0x8] sm:$0xff]
    %v52 = vstv %s44
    %v53 = vmul.f32 %v48, %v52
    %v54 = vmul.f32 %v49, %v52
    %v55 = vround.ne.pseudo %v53
    %v56 = vround.ne.pseudo %v54
    %v57 = vmax.f32 %v55, -128.0
    %v58 = vmax.f32 %v56, -128.0
    %v59 = vmin.f32 %v57, 127.0
    %v60 = vmin.f32 %v58, 127.0
    %v61 = vmul.f32 %v50, %v52
    %v62 = vmul.f32 %v51, %v52
    %v63 = vround.ne.pseudo %v61
    %v64 = vround.ne.pseudo %v62
    %v65 = vmax.f32 %v63, -128.0
    %v66 = vmax.f32 %v64, -128.0
    %v67 = vmin.f32 %v65, 127.0
    %v68 = vmin.f32 %v66, 127.0
    %v69 = vadd.f32 %v59, %v67
    %v70 = vadd.f32 %v60, %v68
    %v71 = vstv %s47
    %v72 = vmul.f32 %v69, %v71
    %v73 = vmul.f32 %v70, %v71
    %74 = vst [vmem:[#allocation8] sm:$0xff] %v72
    %75 = vst [vmem:[#allocation8 + $0x8] sm:$0xff] %v73
    // Predicated region
    $region22: #{tpu_custom_call.1} parent=1 // pred_check
      _
    $region23: #{tpu_custom_call.1} parent=1 // pred_check_branch
      %77 = sbr.rel (0) target = $region25
    $region24: #{tpu_custom_call.1} parent=1 // pred_region
      %s79 = ssub.s32 256, 256
      %80 = vsyncadd [#allocation5], %s79
      %s82 = sshll.u32 [#allocation8], 4
      %s83 = int_to_ptr.vmem [resolvable:$true] %s82
      %85 = dma.vmem_to_hbm [thread:$0]  %s83, 256, %s3, [#allocation5]
    $region25: #{tpu_custom_call.1} parent=1 // pred_fallthru
      _
    // Predicated region
    $region26: #{tpu_custom_call.1} parent=1 // pred_check
      _
    $region27: #{tpu_custom_call.1} parent=1 // pred_check_branch
      %87 = sbr.rel (0) target = $region29
    $region28: #{tpu_custom_call.1} parent=1 // pred_region
      %88 = dma.done [#allocation5], 256
    $region29: #{tpu_custom_call.1} parent=1 // pred_fallthru
      _
    %89 = vsyncpa [#allocation4], 1
    %90 = vsyncpa [#allocation7], 1
    %91 = vsyncpa [#allocation5], 1

</llo_original>
